<compile_context>
chip_gen: v7x
topology: tpu7x:2x2x1
jax: 0.10.0
libtpu: 0.0.40
codegen_flags: <defaults>
</compile_context>

<pallas_src>
import functools

import jax
import jax.numpy as jnp
from jax import lax
from jax.experimental import pallas as pl
from jax.experimental.pallas import tpu as pltpu


def _quat_loss_kernel(q1_ref, q2_ref, out_ref, acc_ref, *, t, tiles_per_core, rows_in):
    c = pl.program_id(0)          # TensorCore split (parallel)
    i = pl.program_id(1)          # row-tile within this split (reduction)

    @pl.when(i == 0)
    def _():
        acc_ref[...] = jnp.zeros_like(acc_ref)

    # Elementwise product in f32 (inputs may be bf16; upcast in-kernel).
    p = q1_ref[...].astype(jnp.float32) * q2_ref[...].astype(jnp.float32)

    # Per-quaternion dots via two log-step rolls (XLU slot, ~free vs VPU):
    #   s[l] = p[l] + p[l-1] + p[l-2] + p[l-3]  ->  lanes with l % 4 == 3 hold d_k.
    s = p + pltpu.roll(p, 1, axis=1)
    s = s + pltpu.roll(s, 2, axis=1)

    # Cheap masks: (1,128) lane mask (keep only group-end lanes) and (t,1) row
    # mask (kill partial-boundary / clamped out-of-range rows, NaN-safe select).
    lane_ok = (lax.broadcasted_iota(jnp.int32, (1, 128), 1) & 3) == 3
    b = c * tiles_per_core + i                              # logical global tile index
    row = lax.broadcasted_iota(jnp.int32, (t, 1), 0) + b * t
    ok = jnp.logical_and(lane_ok, row < rows_in)            # (t,128) via broadcast
    d = jnp.where(ok, s, 0.0)

    # Accumulate sum(d^2) into a single (8,128) vreg: sublane-split reshape is
    # layout-free and the axis-0 sum is pure VPU adds (no per-step XLU reduce).
    acc_ref[...] += jnp.sum((d * d).reshape(t // 8, 8, 128), axis=0)

    @pl.when(i == pl.num_programs(1) - 1)
    def _():
        out_ref[...] = acc_ref[...].reshape(1, 8, 128)


def quaternion_loss(q1: jax.Array, q2: jax.Array, *, tile_rows: int = 4096) -> jax.Array:
    """q1, q2: (N, 4) float arrays (f32 or bf16). Returns scalar f32 loss."""
    assert q1.ndim == 2 and q1.shape == q2.shape and q1.shape[-1] == 4
    n = q1.shape[0]
    itemsize = jnp.dtype(q1.dtype).itemsize
    sub = {4: 8, 2: 16, 1: 32}.get(itemsize, 8)   # native sublane tile for the dtype
    g = 32 * sub                                  # quaternions per native (sub,128) slab

    # Tail (< g quaternions): tiny plain-jnp term, keeps the main reshape copy-free.
    n_main = (n // g) * g
    if n_main < n:
        dt = jnp.sum(q1[n_main:].astype(jnp.float32) * q2[n_main:].astype(jnp.float32), axis=-1)
        tail_sum = jnp.sum(dt * dt)
    else:
        tail_sum = jnp.float32(0.0)

    rows = n_main // 32                           # lane-dense rows, multiple of `sub`
    if rows == 0:                                 # degenerate tiny N: all-jnp
        return (1.0 - tail_sum / n).astype(jnp.float32)

    # Lane-dense view: free row-major reshape (bitcast) of the aligned prefix.
    # (For 32*sub-aligned N this is the full array and involves no copy at all.)
    q1r = q1[:n_main].reshape(rows, 128)
    q2r = q2[:n_main].reshape(rows, 128)

    # Tile selection: big tiles amortize the ~0.35us/step grid overhead.
    # t=4096 f32 -> 2 MiB/block; 2 inputs x 2 pipeline buffers = 8 MiB (< default
    # scoped VMEM on v5e/v6e/v7x).  Raise vmem_limit_bytes before going past 8192 on v5e.
    t_cap = max(sub, (int(tile_rows) // sub) * sub)
    t = min(t_cap, rows)
    num_tiles = pl.cdiv(rows, t)
    num_splits = 2 if num_tiles >= 2 else 1       # use both TCs on v7x
    tiles_per_core = pl.cdiv(num_tiles, num_splits)

    def in_map(c, i):
        # Clamp so out-of-range blocks (odd tile counts) re-read the last valid
        # tile; their contribution is zeroed by the in-kernel row mask.
        return (jnp.minimum(c * tiles_per_core + i, num_tiles - 1), 0)

    kernel = functools.partial(
        _quat_loss_kernel, t=t, tiles_per_core=tiles_per_core, rows_in=rows)

    partials = pl.pallas_call(
        kernel,
        out_shape=jax.ShapeDtypeStruct((num_splits, 8, 128), jnp.float32),
        grid=(num_splits, tiles_per_core),
        in_specs=[
            pl.BlockSpec((t, 128), in_map),
            pl.BlockSpec((t, 128), in_map),
        ],
        out_specs=pl.BlockSpec((1, 8, 128), lambda c, i: (c, 0, 0)),
        scratch_shapes=[pltpu.VMEM((8, 128), jnp.float32)],
        compiler_params=pltpu.CompilerParams(
            dimension_semantics=("parallel", "arbitrary"),
        ),
        cost_estimate=pl.CostEstimate(
            flops=10 * rows * 128,
            transcendentals=0,
            bytes_accessed=2 * rows * 128 * itemsize + num_splits * 8 * 128 * 4,
        ),
    )(q1r, q2r)

    total = jnp.sum(partials) + tail_sum          # final tiny reduce in the wrapper
    return (1.0 - total / n).astype(jnp.float32)


def quaternion_loss_ref(q1, q2):
    d = jnp.sum(q1.astype(jnp.float32) * q2.astype(jnp.float32), axis=-1)
    return jnp.mean(1.0 - d * d)


def _unit_quats(key, n, dtype):
    q = jax.random.normal(key, (n, 4), dtype=jnp.float32)
    q = q / jnp.linalg.norm(q, axis=-1, keepdims=True)
    return q.astype(dtype)


if __name__ == "__main__":
    key = jax.random.PRNGKey(0)
    k1, k2, k3, k4 = jax.random.split(key, 4)

    # Case 1: aligned N (multiple of 256) -> fully copy-free wrapper path, single tile.
    N1 = 512
    a1 = _unit_quats(k1, N1, jnp.float32)
    b1 = _unit_quats(k2, N1, jnp.float32)
    out1 = quaternion_loss(a1, b1)
    jax.block_until_ready(out1)
    ref1 = quaternion_loss_ref(a1, b1)
    assert jnp.allclose(out1, ref1, atol=2e-5, rtol=2e-5), (out1, ref1)

    # Case 2: misaligned N + small tile -> multi-tile grid, 2-way core split,
    # partial boundary block, jnp tail.
    N2 = 5000
    a2 = _unit_quats(k3, N2, jnp.float32)
    b2 = _unit_quats(k4, N2, jnp.float32)
    out2 = quaternion_loss(a2, b2, tile_rows=16)
    jax.block_until_ready(out2)
    ref2 = quaternion_loss_ref(a2, b2)
    assert jnp.allclose(out2, ref2, atol=2e-5, rtol=2e-5), (out2, ref2)

    # Case 3: bf16 inputs -> 16-sublane-aligned tiles, odd tile count exercises the
    # clamped out-of-range block + row masking.
    a3 = a2.astype(jnp.bfloat16)
    b3 = b2.astype(jnp.bfloat16)
    out3 = quaternion_loss(a3, b3, tile_rows=32)
    jax.block_until_ready(out3)
    ref3 = quaternion_loss_ref(a3, b3)
    assert jnp.allclose(out3, ref3, atol=2e-5, rtol=2e-5), (out3, ref3)

    print("KERNEL_OK")
</pallas_src>

<mosaic_0001>
module attributes {stable_mosaic.version = 11 : i64} {
  func.func @_quat_loss_kernel(%arg0: i32, %arg1: i32, %arg2: memref<16x128xf32, #tpu.memory_space<vmem>>, %arg3: memref<16x128xf32, #tpu.memory_space<vmem>>, %arg4: memref<1x8x128xf32, #tpu.memory_space<vmem>>, %arg5: memref<8x128xf32, #tpu.memory_space<vmem>>) attributes {dimension_semantics = [#tpu.dimension_semantics<parallel>, #tpu.dimension_semantics<arbitrary>], iteration_bounds = array<i64: 1, 1>, scalar_prefetch = 0 : i64, scratch_operands = 1 : i64, tpu.core_type = #tpu.core_type<tc>, window_params = [{transform_indices = @transform_0, window_bounds = array<i64: 16, 128>}, {transform_indices = @transform_1, window_bounds = array<i64: 16, 128>}, {transform_indices = @transform_2, window_bounds = array<i64: 1, 8, 128>}]} {
    %c0_i32 = arith.constant 0 : i32
    %0 = arith.cmpi eq, %arg1, %c0_i32 : i32
    %1 = arith.extui %0 : i1 to i32
    %c0_i32_0 = arith.constant 0 : i32
    %2 = arith.cmpi ne, %1, %c0_i32_0 : i32
    scf.if %2 {
      %cst_14 = arith.constant 0.000000e+00 : f32
      %37 = vector.broadcast %cst_14 : f32 to vector<8x128xf32>
      %c0_15 = arith.constant 0 : index
      %c0_16 = arith.constant 0 : index
      %38 = vector.load %arg5[%c0_15, %c0_16] : memref<8x128xf32, #tpu.memory_space<vmem>>, vector<8x128xf32>
      tpu.vector_store %arg5[%c0_15, %c0_16], %37 {strides = array<i32>} : memref<8x128xf32, #tpu.memory_space<vmem>>, vector<8x128xf32>,
    } else {
    }
    %c0 = arith.constant 0 : index
    %c0_1 = arith.constant 0 : index
    %3 = vector.load %arg2[%c0, %c0_1] : memref<16x128xf32, #tpu.memory_space<vmem>>, vector<16x128xf32>
    %c0_2 = arith.constant 0 : index
    %c0_3 = arith.constant 0 : index
    %4 = vector.load %arg3[%c0_2, %c0_3] : memref<16x128xf32, #tpu.memory_space<vmem>>, vector<16x128xf32>
    %5 = arith.mulf %3, %4 : vector<16x128xf32>
    %c1_i32 = arith.constant 1 : i32
    %6 = tpu.dynamic_rotate %5 by %c1_i32 dim 1 : vector<16x128xf32>, i32 -> vector<16x128xf32>
    %7 = arith.addf %5, %6 : vector<16x128xf32>
    %c2_i32 = arith.constant 2 : i32
    %8 = tpu.dynamic_rotate %7 by %c2_i32 dim 1 : vector<16x128xf32>, i32 -> vector<16x128xf32>
    %9 = arith.addf %7, %8 : vector<16x128xf32>
    %10 = tpu.iota {dimensions = array<i32: 1>} : vector<1x128xi32>
    %c3_i32 = arith.constant 3 : i32
    %11 = vector.broadcast %c3_i32 : i32 to vector<1x128xi32>
    %12 = arith.andi %10, %11 : vector<1x128xi32>
    %c3_i32_4 = arith.constant 3 : i32
    %13 = vector.broadcast %c3_i32_4 : i32 to vector<1x128xi32>
    %14 = arith.cmpi eq, %12, %13 : vector<1x128xi32>
    %c1_i32_5 = arith.constant 1 : i32
    %15 = arith.muli %arg0, %c1_i32_5 : i32
    %16 = arith.addi %15, %arg1 : i32
    %17 = tpu.iota {dimensions = array<i32: 0>} : vector<16x1xi32>
    %c16_i32 = arith.constant 16 : i32
    %18 = arith.muli %16, %c16_i32 : i32
    %19 = vector.broadcast %18 : i32 to vector<16x1xi32>
    %20 = arith.addi %17, %19 : vector<16x1xi32>
    %c16_i32_6 = arith.constant 16 : i32
    %21 = vector.broadcast %c16_i32_6 : i32 to vector<16x1xi32>
    %22 = arith.cmpi slt, %20, %21 : vector<16x1xi32>
    %23 = vector.broadcast %14 : vector<1x128xi1> to vector<16x128xi1>
    %24 = vector.broadcast %22 : vector<16x1xi1> to vector<16x128xi1>
    %25 = arith.andi %23, %24 : vector<16x128xi1>
    %cst = arith.constant 0.000000e+00 : f32
    %26 = vector.broadcast %cst : f32 to vector<16x128xf32>
    %27 = arith.select %25, %9, %26 : vector<16x128xi1>, vector<16x128xf32>
    %c0_7 = arith.constant 0 : index
    %c0_8 = arith.constant 0 : index
    %28 = vector.load %arg5[%c0_7, %c0_8] : memref<8x128xf32, #tpu.memory_space<vmem>>, vector<8x128xf32>
    %29 = arith.mulf %27, %27 : vector<16x128xf32>
    %30 = vector.shape_cast %29 : vector<16x128xf32> to vector<2x8x128xf32>
    %cst_9 = arith.constant dense<0.000000e+00> : vector<8x128xf32>
    %31 = vector.multi_reduction <add>, %30, %cst_9 [0] : vector<2x8x128xf32> to vector<8x128xf32>
    %32 = arith.addf %28, %31 : vector<8x128xf32>
    %c0_10 = arith.constant 0 : index
    %c0_11 = arith.constant 0 : index
    %33 = vector.load %arg5[%c0_10, %c0_11] : memref<8x128xf32, #tpu.memory_space<vmem>>, vector<8x128xf32>
    tpu.vector_store %arg5[%c0_10, %c0_11], %32 {strides = array<i32>} : memref<8x128xf32, #tpu.memory_space<vmem>>, vector<8x128xf32>,
    %c0_i32_12 = arith.constant 0 : i32
    %34 = arith.cmpi eq, %arg1, %c0_i32_12 : i32
    %35 = arith.extui %34 : i1 to i32
    %c0_i32_13 = arith.constant 0 : i32
    %36 = arith.cmpi ne, %35, %c0_i32_13 : i32
    scf.if %36 {
      %c0_14 = arith.constant 0 : index
      %c0_15 = arith.constant 0 : index
      %37 = vector.load %arg5[%c0_14, %c0_15] : memref<8x128xf32, #tpu.memory_space<vmem>>, vector<8x128xf32>
      %38 = vector.shape_cast %37 : vector<8x128xf32> to vector<1x8x128xf32>
      %c0_16 = arith.constant 0 : index
      %c0_17 = arith.constant 0 : index
      %c0_18 = arith.constant 0 : index
      %39 = vector.load %arg4[%c0_16, %c0_17, %c0_18] : memref<1x8x128xf32, #tpu.memory_space<vmem>>, vector<1x8x128xf32>
      tpu.vector_store %arg4[%c0_16, %c0_17, %c0_18], %38 {strides = array<i32>} : memref<1x8x128xf32, #tpu.memory_space<vmem>>, vector<1x8x128xf32>,
    } else {
    }
    return
  }
  func.func @transform_0(%arg0: i32, %arg1: i32) -> (i32, i32) {
    %c1_i32 = arith.constant 1 : i32
    %0 = arith.muli %arg0, %c1_i32 : i32
    %1 = arith.addi %0, %arg1 : i32
    %c0_i32 = arith.constant 0 : i32
    %2 = arith.minsi %1, %c0_i32 : i32
    %c0_i32_0 = arith.constant 0 : i32
    %c0_i32_1 = arith.constant 0 : i32
    return %2, %c0_i32_0 : i32, i32
  }
  func.func @transform_1(%arg0: i32, %arg1: i32) -> (i32, i32) {
    %c1_i32 = arith.constant 1 : i32
    %0 = arith.muli %arg0, %c1_i32 : i32
    %1 = arith.addi %0, %arg1 : i32
    %c0_i32 = arith.constant 0 : i32
    %2 = arith.minsi %1, %c0_i32 : i32
    %c0_i32_0 = arith.constant 0 : i32
    %c0_i32_1 = arith.constant 0 : i32
    return %2, %c0_i32_0 : i32, i32
  }
  func.func @transform_2(%arg0: i32, %arg1: i32) -> (i32, i32, i32) {
    %c0_i32 = arith.constant 0 : i32
    %c0_i32_0 = arith.constant 0 : i32
    %c0_i32_1 = arith.constant 0 : i32
    return %arg0, %c0_i32, %c0_i32_0 : i32, i32, i32
  }
}

</mosaic_0001>

<llo_original>
// kernel: tpu_custom_call.1
$region0: #{tpu_custom_call.1}
  #allocation0 [shape = 'u32[]', space=smem, size = 0x4, offset = 0x4, fixed_abs, tag = 'smem constant byte address 0x4 - core index']
  #allocation1 [shape = 'u32[144,128]{1,0:T(1,128)}', space=vmem, size = 0x12000, scoped, tag = 'internal scratch']
  #allocation2 [shape = 'f32[8,128]{1,0:T(8,128)}', space=vmem, size = 0x1000, scoped, tag = 'scratch operand']
  %s0 = inlined_call_operand.hbm [shape: f32[16,128], index: 0, kind: input, shape index: {}]
  %s1 = inlined_call_operand.hbm [shape: f32[16,128], index: 1, kind: input, shape index: {}]
  %s2 = inlined_call_operand.hbm [shape: f32[1,8,128], index: 2, kind: output, shape index: {}]
  %s3 = sld [smem:[#allocation0]]
  $region34: #{tpu_custom_call.1} parent=0
    _
  %s5 = ssub.s32 1, %s3
  %s6 = scalar_select 0, %s5, %s3
  $region1: #{tpu_custom_call.1} parent=0
    #allocation3 [shape = 'u8[8192]{0}', space=vmem, size = 0x2000, scoped, tag = 'input window, operand 0, single buffered']
    #allocation4 [shape = 's32[1]{0}', space=sflag, size = 0x4, scoped, tag = 'scoped memory for tpu_custom_call.1']
    #allocation5 [shape = 's32[1]{0}', space=sflag, size = 0x4, scoped, tag = 'scoped memory for tpu_custom_call.1']
    #allocation6 [shape = 'u8[8192]{0}', space=vmem, size = 0x2000, scoped, tag = 'input window, operand 1, single buffered']
    #allocation7 [shape = 's32[1]{0}', space=sflag, size = 0x4, scoped, tag = 'scoped memory for tpu_custom_call.1']
    #allocation8 [shape = 'u8[4096]{0}', space=vmem, size = 0x1000, scoped, tag = 'output window, operand 0, single buffered']
    %7 = vsyncpa [#allocation4], 0
    %8 = vsyncpa [#allocation7], 0
    %9 = vsyncpa [#allocation5], 0
    // Predicated region
    $region2: #{tpu_custom_call.1} parent=1 // pred_check
      _
    $region3: #{tpu_custom_call.1} parent=1 // pred_check_branch
      %11 = sbr.rel (0) target = $region5
    $region4: #{tpu_custom_call.1} parent=1 // pred_region
      %s12 = sadd.s32 0, 0
      %p13 = scmp.lt.s32.totalorder %s12, 0
      %s14 = scalar_select %p13, %s12, 0
      %s15 = smul.u32 2, %s14
      %s17 = ssub.s32 256, 256
      %18 = vsyncadd [#allocation4], %s17
      %s19 = smul.addr %s15, 128
      %s20 = scalar_lea.hbm %s0, %s19
      %s21 = sshll.u32 [#allocation3], 4
      %s22 = int_to_ptr.vmem [resolvable:$true] %s21
      %27 = dma.hbm_to_vmem [thread:$0]  %s20, 256, %s22, [#allocation4], 128, 128, 8
    $region5: #{tpu_custom_call.1} parent=1 // pred_fallthru
      _
    // Predicated region
    $region6: #{tpu_custom_call.1} parent=1 // pred_check
      _
    $region7: #{tpu_custom_call.1} parent=1 // pred_check_branch
      %29 = sbr.rel (0) target = $region9
    $region8: #{tpu_custom_call.1} parent=1 // pred_region
      %s30 = sadd.s32 0, 0
      %p31 = scmp.lt.s32.totalorder %s30, 0
      %s32 = scalar_select %p31, %s30, 0
      %s33 = smul.u32 2, %s32
      %s35 = ssub.s32 256, 256
      %36 = vsyncadd [#allocation7], %s35
      %s37 = smul.addr %s33, 128
      %s38 = scalar_lea.hbm %s1, %s37
      %s39 = sshll.u32 [#allocation6], 4
      %s40 = int_to_ptr.vmem [resolvable:$true] %s39
      %45 = dma.hbm_to_vmem [thread:$0]  %s38, 256, %s40, [#allocation7], 128, 128, 8
    $region9: #{tpu_custom_call.1} parent=1 // pred_fallthru
      _
    // Predicated region
    $region10: #{tpu_custom_call.1} parent=1 // pred_check
      _
    $region11: #{tpu_custom_call.1} parent=1 // pred_check_branch
      %47 = sbr.rel (0) target = $region13
    $region12: #{tpu_custom_call.1} parent=1 // pred_region
      %48 = dma.done [#allocation4], 256
    $region13: #{tpu_custom_call.1} parent=1 // pred_fallthru
      _
    // Predicated region
    $region14: #{tpu_custom_call.1} parent=1 // pred_check
      _
    $region15: #{tpu_custom_call.1} parent=1 // pred_check_branch
      %50 = sbr.rel (0) target = $region17
    $region16: #{tpu_custom_call.1} parent=1 // pred_region
      %51 = dma.done [#allocation7], 256
    $region17: #{tpu_custom_call.1} parent=1 // pred_fallthru
      _
    %s52 = sadd.s32 0, 0
    %p53 = scmp.lt.s32.totalorder %s52, 0
    %s54 = scalar_select %p53, %s52, 0
    %s55 = smul.u32 2, %s54
    %s56 = sadd.s32 0, 0
    %p57 = scmp.lt.s32.totalorder %s56, 0
    %s58 = scalar_select %p57, %s56, 0
    %s59 = smul.u32 2, %s58
    %p60 = scmp.eq.s32.totalorder 0, 0
    // Predicated region
    $region18: #{tpu_custom_call.1} parent=1 // pred_check
      %p61 = pneg %p60
    $region19: #{tpu_custom_call.1} parent=1 // pred_check_branch
      %63 = sbr.rel (%p61) target = $region21
    $region20: #{tpu_custom_call.1} parent=1 // pred_region
      %64 = vst [vmem:[#allocation2] sm:$0xff] 0.0
    $region21: #{tpu_custom_call.1} parent=1 // pred_fallthru
      _
    %v65 = vld [vmem:[#allocation3] sm:$0xff]
    %v66 = vld [vmem:[#allocation3 + $0x8] sm:$0xff]
    %v67 = vld [vmem:[#allocation6] sm:$0xff]
    %v68 = vld [vmem:[#allocation6 + $0x8] sm:$0xff]
    %v69 = vmul.f32 %v65, %v67
    %v70 = vmul.f32 %v66, %v68
    %71 = vrot.lane.b32.xlu0 %v69, 1
    %v72 = vpop.permute.xlu0 %71
    %73 = vrot.lane.b32.xlu0 %v70, 1
    %v74 = vpop.permute.xlu0 %73
    %v75 = vadd.f32 %v69, %v72
    %v76 = vadd.f32 %v70, %v74
    %77 = vrot.lane.b32.xlu0 %v75, 2
    %v78 = vpop.permute.xlu0 %77
    %79 = vrot.lane.b32.xlu0 %v76, 2
    %v80 = vpop.permute.xlu0 %79
    %v81 = vadd.f32 %v75, %v78
    %v82 = vadd.f32 %v76, %v80
    %v83 = vlaneseq
    %v84 = vand.u32 %v83, 127
    %v85 = vand.u32 %v84, 3
    %vm86 = vcmp.eq.s32.totalorder %v85, 3
    %s87 = sadd.s32 0, 0
    %v88 = vlaneseq
    %v89 = vshrl.u32 %v88, 7
    %v90 = vadd.s32 %v89, 8
    %s91 = smul.u32 %s87, 16
    %v92 = vstv %s91
    %v93 = vadd.s32 %v89, %v92
    %v94 = vadd.s32 %v90, %v92
    %vm95 = vcmp.lt.s32.totalorder %v93, 16
    %vm96 = vcmp.lt.s32.totalorder %v94, 16
    %v97 = vsel %vm86, 1, 0
    %vm98 = vcmp.eq.s32.totalorder %v97, 1
    %v99 = vsel %vm95, 1, 0
    %v100 = vsel %vm96, 1, 0
    %vm101 = vcmp.eq.s32.totalorder %v99, 1
    %vm102 = vcmp.eq.s32.totalorder %v100, 1
    %vm103 = vmand %vm98, %vm101
    %vm104 = vmand %vm98, %vm102
    %v105 = vsel %vm103, %v81, 0.0
    %v106 = vsel %vm104, %v82, 0.0
    %v107 = vld [vmem:[#allocation2] sm:$0xff]
    %v108 = vmul.f32 %v105, %v105
    %v109 = vmul.f32 %v106, %v106
    %v110 = vadd.f32 %v108, %v109
    %v111 = vadd.f32 %v107, %v110
    %112 = vst [vmem:[#allocation2] sm:$0xff] %v111
    // Predicated region
    $region22: #{tpu_custom_call.1} parent=1 // pred_check
      %p113 = pneg %p60
    $region23: #{tpu_custom_call.1} parent=1 // pred_check_branch
      %115 = sbr.rel (%p113) target = $region25
    $region24: #{tpu_custom_call.1} parent=1 // pred_region
      %v116 = vld [vmem:[#allocation2] sm:$0xff]
      %117 = vst [vmem:[#allocation8] sm:$0xff] %v116
    $region25: #{tpu_custom_call.1} parent=1 // pred_fallthru
      _
    // Predicated region
    $region26: #{tpu_custom_call.1} parent=1 // pred_check
      _
    $region27: #{tpu_custom_call.1} parent=1 // pred_check_branch
      %119 = sbr.rel (0) target = $region29
    $region28: #{tpu_custom_call.1} parent=1 // pred_region
      %s121 = ssub.s32 128, 128
      %122 = vsyncadd [#allocation5], %s121
      %s124 = sshll.u32 [#allocation8], 4
      %s125 = int_to_ptr.vmem [resolvable:$true] %s124
      %127 = dma.vmem_to_hbm [thread:$0]  %s125, 128, %s2, [#allocation5]
    $region29: #{tpu_custom_call.1} parent=1 // pred_fallthru
      _
    // Predicated region
    $region30: #{tpu_custom_call.1} parent=1 // pred_check
      _
    $region31: #{tpu_custom_call.1} parent=1 // pred_check_branch
      %129 = sbr.rel (0) target = $region33
    $region32: #{tpu_custom_call.1} parent=1 // pred_region
      %130 = dma.done [#allocation5], 128
    $region33: #{tpu_custom_call.1} parent=1 // pred_fallthru
      _
    %131 = vsyncpa [#allocation4], 1
    %132 = vsyncpa [#allocation7], 1
    %133 = vsyncpa [#allocation5], 1

</llo_original>
